<compile_context>
chip_gen: v6e
topology: v6e:2x2x1
jax: 0.10.0
libtpu: 0.0.40
codegen_flags: <defaults>
</compile_context>

<pallas_src>
import functools

import jax
import jax.numpy as jnp
from jax.experimental import pallas as pl
from jax.experimental.pallas import tpu as pltpu


def _cls_prediction_kernel(x_ref, w1_ref, b1_ref, gw2_ref, c_ref, o_ref, *, eps):
    # x_ref:   (tm, D_in)  activation tile (native dtype -> MXU input)
    # w1_ref:  (D_in, H)   first Linear weight, stored (in, out)
    # b1_ref:  (1, H)      first Linear bias
    # gw2_ref: (8, H)      gamma * w2[:, 0], broadcast to 8 sublanes
    # c_ref:   (1,) SMEM   beta @ w2[:, 0] + b2
    # o_ref:   (1, 1, tm)  lane-dense per-row outputs

    # Linear 1 on the MXU: inputs in native dtype, f32 accumulation.
    h = jnp.dot(x_ref[...], w1_ref[...], preferred_element_type=jnp.float32)
    h = jnp.maximum(h + b1_ref[...].astype(jnp.float32), 0.0)      # ReLU, (tm, H) f32

    # BertLayerNorm statistics (biased variance, eps inside the sqrt).
    mu = jnp.mean(h, axis=-1, keepdims=True)                        # (tm, 1)
    d = h - mu
    var = jnp.mean(d * d, axis=-1, keepdims=True)                   # (tm, 1)
    dn = d * jax.lax.rsqrt(var + eps)                               # (tm, H)

    # Fused (LayerNorm affine + Linear 2): out[i] = dn[i,:] . gw2 + c.
    # NT contraction puts the per-row scalars along the LANE axis -> lane-dense store.
    gw2 = gw2_ref[...].astype(jnp.float32)                          # (8, H)
    r = jax.lax.dot_general(gw2, dn, (((1,), (1,)), ((), ())),
                            preferred_element_type=jnp.float32)     # (8, tm)
    out_row = r[0:1, :] + c_ref[0]                                  # (1, tm)
    o_ref[...] = out_row[None].astype(o_ref.dtype)                  # (1, 1, tm)


def cls_prediction(x, w1, b1, gamma, beta, w2, b2, *, eps=1e-12, tm=256):
    """ClsPrediction forward: x (N, D_in) -> (N, 1).

    tm: row tile. Prefer multiples of 128 (v5e) / 256 (v6e, v7x); cap around 128-256
    for very large hidden sizes so the (tm, H) f32 intermediates stay comfortably in
    VMEM (raise pltpu.CompilerParams(vmem_limit_bytes=...) if you go bigger).
    """
    N, D_in = x.shape
    H = w1.shape[1]

    G = pl.cdiv(N, tm)
    N_pad = G * tm
    x_pad = jnp.pad(x, ((0, N_pad - N), (0, 0))) if N_pad != N else x

    f32 = jnp.float32
    b1_2d = b1.reshape(1, H)
    # Fold gamma into w2, and (beta, b2) into a single scalar constant.
    gw2 = (gamma.astype(f32) * w2[:, 0].astype(f32)).reshape(1, H)
    gw2_8 = jnp.broadcast_to(gw2, (8, H))
    c = (jnp.dot(beta.astype(f32), w2[:, 0].astype(f32)) + b2.astype(f32)[0]).reshape(1)

    kernel = functools.partial(_cls_prediction_kernel, eps=eps)

    out = pl.pallas_call(
        kernel,
        out_shape=jax.ShapeDtypeStruct((G, 1, tm), x.dtype),
        grid_spec=pltpu.PrefetchScalarGridSpec(
            num_scalar_prefetch=0,
            grid=(G,),
            in_specs=[
                pl.BlockSpec((tm, D_in), lambda i: (i, 0)),          # x tile (pipelined)
                # Constant-index params: fetched once, resident across the grid.
                pl.BlockSpec((D_in, H), lambda i: (0, 0)),           # W1
                pl.BlockSpec((1, H), lambda i: (0, 0)),              # b1
                pl.BlockSpec((8, H), lambda i: (0, 0)),              # gamma * w2
                pl.BlockSpec(memory_space=pltpu.MemorySpace.SMEM),   # scalar c
            ],
            out_specs=pl.BlockSpec((1, 1, tm), lambda i: (i, 0, 0)),
        ),
        compiler_params=pltpu.CompilerParams(
            dimension_semantics=("parallel",)),  # row tiles shard across v7x's 2 TCs
    )(x_pad, w1, b1_2d, gw2_8, c)

    # (G, 1, tm) lane-dense slab -> (N, 1), dropping the padded tail rows.
    return out.reshape(N_pad, 1)[:N]


def cls_prediction_ref(x, w1, b1, gamma, beta, w2, b2, eps=1e-12):
    h = jnp.maximum(x.astype(jnp.float32) @ w1 + b1, 0.0)
    mu = jnp.mean(h, axis=-1, keepdims=True)
    var = jnp.mean((h - mu) ** 2, axis=-1, keepdims=True)
    hn = (h - mu) * jax.lax.rsqrt(var + eps) * gamma + beta
    return hn @ w2 + b2.reshape(1, 1)


if __name__ == "__main__":
    key = jax.random.PRNGKey(0)
    # Small shapes consistent with the module; N deliberately NOT a tile multiple to
    # exercise the padded-tail path, and tm=128 gives a 2-step row grid.
    N, input_size, hidden_size = 200, 32, 32

    k_x, k_w1, k_b1, k_g, k_be, k_w2, k_b2 = jax.random.split(key, 7)
    x = jax.random.normal(k_x, (N, input_size), jnp.float32)

    # Deterministic synthetic parameters (Linear weights stored as (in, out)).
    w1 = jax.random.normal(k_w1, (input_size, hidden_size), jnp.float32) * 0.05
    b1 = jax.random.normal(k_b1, (hidden_size,), jnp.float32) * 0.05
    gamma = jnp.ones((hidden_size,), jnp.float32) + 0.1 * jax.random.normal(
        k_g, (hidden_size,), jnp.float32)
    beta = 0.1 * jax.random.normal(k_be, (hidden_size,), jnp.float32)
    w2 = jax.random.normal(k_w2, (hidden_size, 1), jnp.float32) * 0.05
    b2 = jax.random.normal(k_b2, (1,), jnp.float32) * 0.05

    out = cls_prediction(x, w1, b1, gamma, beta, w2, b2, tm=128)
    out = jax.block_until_ready(out)

    ref = cls_prediction_ref(x, w1, b1, gamma, beta, w2, b2)
    assert out.shape == (N, 1), out.shape
    assert jnp.allclose(out, ref, atol=2e-5, rtol=2e-5), float(
        jnp.max(jnp.abs(out - ref)))

    print("KERNEL_OK")
</pallas_src>

<mosaic_0001>
module attributes {stable_mosaic.version = 11 : i64} {
  func.func @_cls_prediction_kernel(%arg0: i32, %arg1: memref<128x32xf32, #tpu.memory_space<vmem>>, %arg2: memref<32x32xf32, #tpu.memory_space<vmem>>, %arg3: memref<1x32xf32, #tpu.memory_space<vmem>>, %arg4: memref<8x32xf32, #tpu.memory_space<vmem>>, %arg5: memref<1xf32, #tpu.memory_space<smem>>, %arg6: memref<1x1x128xf32, #tpu.memory_space<vmem>>) attributes {dimension_semantics = [#tpu.dimension_semantics<parallel>], iteration_bounds = array<i64: 2>, scalar_prefetch = 0 : i64, scratch_operands = 0 : i64, tpu.core_type = #tpu.core_type<tc>, window_params = [{transform_indices = @transform_0, window_bounds = array<i64: 128, 32>}, {pipeline_mode = #tpu.pipeline_mode<synchronous>, transform_indices = @transform_1, window_bounds = array<i64: 32, 32>}, {pipeline_mode = #tpu.pipeline_mode<synchronous>, transform_indices = @transform_2, window_bounds = array<i64: 1, 32>}, {pipeline_mode = #tpu.pipeline_mode<synchronous>, transform_indices = @transform_3, window_bounds = array<i64: 8, 32>}, {transform_indices = @transform_4, window_bounds = array<i64: 1>}, {transform_indices = @transform_5, window_bounds = array<i64: 1, 1, 128>}]} {
    %c0 = arith.constant 0 : index
    %c0_0 = arith.constant 0 : index
    %0 = vector.load %arg1[%c0, %c0_0] : memref<128x32xf32, #tpu.memory_space<vmem>>, vector<128x32xf32>
    %c0_1 = arith.constant 0 : index
    %c0_2 = arith.constant 0 : index
    %1 = vector.load %arg2[%c0_1, %c0_2] : memref<32x32xf32, #tpu.memory_space<vmem>>, vector<32x32xf32>
    %cst = arith.constant dense<0.000000e+00> : vector<128x32xf32>
    %2 = tpu.matmul %0, %1, %cst {dimension_numbers = #tpu.dot_dimension_numbers<[1], [0], [0], [1], [0, 0, 1, 1], [], []>} : vector<128x32xf32>, vector<32x32xf32>, vector<128x32xf32> -> vector<128x32xf32>
    %c0_3 = arith.constant 0 : index
    %c0_4 = arith.constant 0 : index
    %3 = vector.load %arg3[%c0_3, %c0_4] : memref<1x32xf32, #tpu.memory_space<vmem>>, vector<1x32xf32>
    %4 = vector.broadcast %3 : vector<1x32xf32> to vector<128x32xf32>
    %5 = arith.addf %2, %4 : vector<128x32xf32>
    %cst_5 = arith.constant 0.000000e+00 : f32
    %6 = vector.broadcast %cst_5 : f32 to vector<128x32xf32>
    %7 = arith.maximumf %5, %6 : vector<128x32xf32>
    %cst_6 = arith.constant dense<0.000000e+00> : vector<128xf32>
    %8 = vector.multi_reduction <add>, %7, %cst_6 [1] : vector<128x32xf32> to vector<128xf32>
    %9 = vector.shape_cast %8 : vector<128xf32> to vector<128x1xf32>
    %cst_7 = arith.constant 3.200000e+01 : f32
    %10 = vector.broadcast %cst_7 : f32 to vector<128x1xf32>
    %11 = arith.divf %9, %10 : vector<128x1xf32>
    %12 = vector.broadcast %11 : vector<128x1xf32> to vector<128x32xf32>
    %13 = arith.subf %7, %12 : vector<128x32xf32>
    %14 = arith.mulf %13, %13 : vector<128x32xf32>
    %cst_8 = arith.constant dense<0.000000e+00> : vector<128xf32>
    %15 = vector.multi_reduction <add>, %14, %cst_8 [1] : vector<128x32xf32> to vector<128xf32>
    %16 = vector.shape_cast %15 : vector<128xf32> to vector<128x1xf32>
    %cst_9 = arith.constant 3.200000e+01 : f32
    %17 = vector.broadcast %cst_9 : f32 to vector<128x1xf32>
    %18 = arith.divf %16, %17 : vector<128x1xf32>
    %cst_10 = arith.constant 9.99999996E-13 : f32
    %19 = vector.broadcast %cst_10 : f32 to vector<128x1xf32>
    %20 = arith.addf %18, %19 : vector<128x1xf32>
    %21 = math.rsqrt %20 : vector<128x1xf32>
    %22 = vector.broadcast %21 : vector<128x1xf32> to vector<128x32xf32>
    %23 = arith.mulf %13, %22 : vector<128x32xf32>
    %c0_11 = arith.constant 0 : index
    %c0_12 = arith.constant 0 : index
    %24 = vector.load %arg4[%c0_11, %c0_12] : memref<8x32xf32, #tpu.memory_space<vmem>>, vector<8x32xf32>
    %cst_13 = arith.constant dense<0.000000e+00> : vector<8x128xf32>
    %25 = tpu.matmul %24, %23, %cst_13 {dimension_numbers = #tpu.dot_dimension_numbers<[1], [1], [0], [0], [0, 0, 1, 0], [], []>} : vector<8x32xf32>, vector<128x32xf32>, vector<8x128xf32> -> vector<8x128xf32>
    %26 = vector.extract_strided_slice %25 {offsets = [0, 0], sizes = [1, 128], strides = [1, 1]} : vector<8x128xf32> to vector<1x128xf32>
    %c0_14 = arith.constant 0 : index
    %27 = memref.load %arg5[%c0_14] : memref<1xf32, #tpu.memory_space<smem>>
    %28 = vector.broadcast %27 : f32 to vector<1x128xf32>
    %29 = arith.addf %26, %28 : vector<1x128xf32>
    %30 = vector.shape_cast %29 : vector<1x128xf32> to vector<1x1x128xf32>
    %c0_15 = arith.constant 0 : index
    %c0_16 = arith.constant 0 : index
    %c0_17 = arith.constant 0 : index
    %31 = vector.load %arg6[%c0_15, %c0_16, %c0_17] : memref<1x1x128xf32, #tpu.memory_space<vmem>>, vector<1x1x128xf32>
    tpu.vector_store %arg6[%c0_15, %c0_16, %c0_17], %30 {strides = array<i32>} : memref<1x1x128xf32, #tpu.memory_space<vmem>>, vector<1x1x128xf32>,
    return
  }
  func.func @transform_0(%arg0: i32) -> (i32, i32) {
    %c0_i32 = arith.constant 0 : i32
    %c0_i32_0 = arith.constant 0 : i32
    return %arg0, %c0_i32 : i32, i32
  }
  func.func @transform_1(%arg0: i32) -> (i32, i32) {
    %c0_i32 = arith.constant 0 : i32
    %c0_i32_0 = arith.constant 0 : i32
    %c0_i32_1 = arith.constant 0 : i32
    return %c0_i32, %c0_i32_0 : i32, i32
  }
  func.func @transform_2(%arg0: i32) -> (i32, i32) {
    %c0_i32 = arith.constant 0 : i32
    %c0_i32_0 = arith.constant 0 : i32
    %c0_i32_1 = arith.constant 0 : i32
    return %c0_i32, %c0_i32_0 : i32, i32
  }
  func.func @transform_3(%arg0: i32) -> (i32, i32) {
    %c0_i32 = arith.constant 0 : i32
    %c0_i32_0 = arith.constant 0 : i32
    %c0_i32_1 = arith.constant 0 : i32
    return %c0_i32, %c0_i32_0 : i32, i32
  }
  func.func @transform_4(%arg0: i32) -> i32 {
    %c0_i32 = arith.constant 0 : i32
    %c0_i32_0 = arith.constant 0 : i32
    return %c0_i32 : i32
  }
  func.func @transform_5(%arg0: i32) -> (i32, i32, i32) {
    %c0_i32 = arith.constant 0 : i32
    %c0_i32_0 = arith.constant 0 : i32
    %c0_i32_1 = arith.constant 0 : i32
    return %arg0, %c0_i32, %c0_i32_0 : i32, i32, i32
  }
}

</mosaic_0001>

<llo_original>
// kernel: tpu_custom_call.1
$region0: #{tpu_custom_call.1}
  #allocation0 [shape = 'u32[]', space=smem, size = 0x4, offset = 0x4, fixed_abs, tag = 'smem constant byte address 0x4 - core index']
  #allocation1 [shape = 'u32[144,128]{1,0:T(1,128)}', space=vmem, size = 0x12000, scoped, tag = 'internal scratch']
  #allocation2 [shape = 'f32[1]{0:T(128)S(6)}', space=smem, size = 0x200, scoped, tag = 'scoped memory for tpu_custom_call.1']
  %s0 = inlined_call_operand.vmem [shape: f32[256,32], index: 0, kind: input, shape index: {}]
  %s1 = inlined_call_operand.vmem [shape: f32[32,32], index: 1, kind: input, shape index: {}]
  %s2 = inlined_call_operand.vmem [shape: f32[1,32], index: 2, kind: input, shape index: {}]
  %s3 = inlined_call_operand.vmem [shape: f32[8,32], index: 3, kind: input, shape index: {}]
  %s4 = inlined_call_operand.<no memory space> [shape: f32[1], index: 4, kind: input, shape index: {}]
  %s5 = inlined_call_operand.hbm [shape: f32[2,1,128], index: 5, kind: output, shape index: {}]
  %s6 = sld [smem:[#allocation0]]
  $region53: #{tpu_custom_call.1} parent=0
    _
  %s8 = ssub.s32 1, %s6
  %s9 = scalar_select 0, %s8, %s6
  %10 = sst [smem:[#allocation2]] %s4
  $region1: #{tpu_custom_call.1} parent=0
    #allocation3 [shape = 'u8[1024]{0}', space=vmem, size = 0x400, scoped, tag = 'output window, operand 0']
    #allocation4 [shape = 's32[2]{0}', space=sflag, size = 0x8, scoped, tag = 'scoped memory for tpu_custom_call.1']
    %11 = vsyncpa [#allocation4], 0
    %s12 = scalar_lea.sflag [#allocation4], 1
    %13 = vsyncpa %s12, 0
    loop: start=0, step=1, limit=4
    $region2: #{tpu_custom_call.1} parent=1 // loop_pre_header
      _
    $region3: #{tpu_custom_call.1} parent=1 // loop_header
      %s15 = sphi 0, %s19
      %p16 = scmp.ge.s32.totalorder %s15, 4
      %s25 = sphi 0, %s27
      %s28 = sphi 0, %s25
      %s29 = sphi 0, %s28
      %s45 = sphi 0, %s29
      %s49 = sphi 0, %s49
      %s51 = sphi 0, %s49
      %s52 = sphi 0, %s51
      %s66 = sphi 0, %s52
      %s70 = sphi 0, %s70
      %s72 = sphi 0, %s70
      %s73 = sphi 0, %s72
      %s87 = sphi 0, %s73
      %s91 = sphi 0, %s91
      %s93 = sphi 0, %s91
      %s94 = sphi 0, %s93
      %s108 = sphi 0, %s94
      %s112 = sphi 0, %s112
      %s114 = sphi 0, %s112
      %s115 = sphi 0, %s114
      %s129 = sphi 0, %s115
      %s135 = sphi 0, %s137
      %s138 = sphi 0, %s135
      %s139 = sphi 0, %s138
      %s155 = sphi 0, %s139
    $region4: #{tpu_custom_call.1} parent=1 // loop_header_branch
      %18 = sbr.rel (%p16) target = $region8
    $region5: #{tpu_custom_call.1} parent=1 // loop_body
      %s20 = ssub.s32 %s15, 1
      %s21 = ssub.s32 %s15, 2
      %s22 = sadd.s32 %s15, 1
      %s23 = ssub.s32 %s15, %s22
      %p24 = scmp.eq.s32.totalorder %s23, 0
      %s26 = sadd.s32 %s25, 1
      %s27 = scalar_select %p24, %s25, %s26
      %p30 = pneg %p24
      %p31 = scmp.eq.s32.totalorder %s15, 1
      %p32 = por %p30, %p31
      %p33 = scmp.ne.s32.totalorder %s25, %s28
      %p34 = scmp.eq.s32.totalorder %s15, 0
      %p35 = por %p33, %p34
      %p36 = scmp.ne.s32.totalorder %s25, %s28
      %p37 = scmp.eq.s32.totalorder %s20, 1
      %p38 = por %p36, %p37
      %p39 = scmp.ne.s32.totalorder %s28, %s29
      %p40 = scmp.eq.s32.totalorder %s20, 0
      %p41 = por %p39, %p40
      %p42 = scmp.ne.s32.totalorder %s28, %s29
      %p43 = scmp.eq.s32.totalorder %s21, 1
      %p44 = por %p42, %p43
      %p46 = scmp.ne.s32.totalorder %s29, %s45
      %p47 = scmp.eq.s32.totalorder %s21, 0
      %p48 = por %p46, %p47
      %s50 = sadd.s32 %s49, 1
      %p53 = scmp.eq.s32.totalorder %s15, 1
      %p54 = scmp.ne.s32.totalorder %s49, %s51
      %p55 = scmp.eq.s32.totalorder %s15, 0
      %p56 = por %p54, %p55
      %p57 = scmp.ne.s32.totalorder %s49, %s51
      %p58 = scmp.eq.s32.totalorder %s20, 1
      %p59 = por %p57, %p58
      %p60 = scmp.ne.s32.totalorder %s51, %s52
      %p61 = scmp.eq.s32.totalorder %s20, 0
      %p62 = por %p60, %p61
      %p63 = scmp.ne.s32.totalorder %s51, %s52
      %p64 = scmp.eq.s32.totalorder %s21, 1
      %p65 = por %p63, %p64
      %p67 = scmp.ne.s32.totalorder %s52, %s66
      %p68 = scmp.eq.s32.totalorder %s21, 0
      %p69 = por %p67, %p68
      %s71 = sadd.s32 %s70, 1
      %p74 = scmp.eq.s32.totalorder %s15, 1
      %p75 = scmp.ne.s32.totalorder %s70, %s72
      %p76 = scmp.eq.s32.totalorder %s15, 0
      %p77 = por %p75, %p76
      %p78 = scmp.ne.s32.totalorder %s70, %s72
      %p79 = scmp.eq.s32.totalorder %s20, 1
      %p80 = por %p78, %p79
      %p81 = scmp.ne.s32.totalorder %s72, %s73
      %p82 = scmp.eq.s32.totalorder %s20, 0
      %p83 = por %p81, %p82
      %p84 = scmp.ne.s32.totalorder %s72, %s73
      %p85 = scmp.eq.s32.totalorder %s21, 1
      %p86 = por %p84, %p85
      %p88 = scmp.ne.s32.totalorder %s73, %s87
      %p89 = scmp.eq.s32.totalorder %s21, 0
      %p90 = por %p88, %p89
      %s92 = sadd.s32 %s91, 1
      %p95 = scmp.eq.s32.totalorder %s15, 1
      %p96 = scmp.ne.s32.totalorder %s91, %s93
      %p97 = scmp.eq.s32.totalorder %s15, 0
      %p98 = por %p96, %p97
      %p99 = scmp.ne.s32.totalorder %s91, %s93
      %p100 = scmp.eq.s32.totalorder %s20, 1
      %p101 = por %p99, %p100
      %p102 = scmp.ne.s32.totalorder %s93, %s94
      %p103 = scmp.eq.s32.totalorder %s20, 0
      %p104 = por %p102, %p103
      %p105 = scmp.ne.s32.totalorder %s93, %s94
      %p106 = scmp.eq.s32.totalorder %s21, 1
      %p107 = por %p105, %p106
      %p109 = scmp.ne.s32.totalorder %s94, %s108
      %p110 = scmp.eq.s32.totalorder %s21, 0
      %p111 = por %p109, %p110
      %s113 = sadd.s32 %s112, 1
      %p116 = scmp.eq.s32.totalorder %s15, 1
      %p117 = scmp.ne.s32.totalorder %s112, %s114
      %p118 = scmp.eq.s32.totalorder %s15, 0
      %p119 = por %p117, %p118
      %p120 = scmp.ne.s32.totalorder %s112, %s114
      %p121 = scmp.eq.s32.totalorder %s20, 1
      %p122 = por %p120, %p121
      %p123 = scmp.ne.s32.totalorder %s114, %s115
      %p124 = scmp.eq.s32.totalorder %s20, 0
      %p125 = por %p123, %p124
      %p126 = scmp.ne.s32.totalorder %s114, %s115
      %p127 = scmp.eq.s32.totalorder %s21, 1
      %p128 = por %p126, %p127
      %p130 = scmp.ne.s32.totalorder %s115, %s129
      %p131 = scmp.eq.s32.totalorder %s21, 0
      %p132 = por %p130, %p131
      %s133 = ssub.s32 %s15, %s22
      %p134 = scmp.eq.s32.totalorder %s133, 0
      %s136 = sadd.s32 %s135, 1
      %s137 = scalar_select %p134, %s135, %s136
      %p140 = pneg %p134
      %p141 = scmp.eq.s32.totalorder %s15, 1
      %p142 = por %p140, %p141
      %p143 = scmp.ne.s32.totalorder %s135, %s138
      %p144 = scmp.eq.s32.totalorder %s15, 0
      %p145 = por %p143, %p144
      %p146 = scmp.ne.s32.totalorder %s135, %s138
      %p147 = scmp.eq.s32.totalorder %s20, 1
      %p148 = por %p146, %p147
      %p149 = scmp.ne.s32.totalorder %s138, %s139
      %p150 = scmp.eq.s32.totalorder %s20, 0
      %p151 = por %p149, %p150
      %p152 = scmp.ne.s32.totalorder %s138, %s139
      %p153 = scmp.eq.s32.totalorder %s21, 1
      %p154 = por %p152, %p153
      %p156 = scmp.ne.s32.totalorder %s139, %s155
      %p157 = scmp.eq.s32.totalorder %s21, 0
      %p158 = por %p156, %p157
      %p159 = scmp.le.s32.totalorder 1, %s15
      %p160 = scmp.lt.s32.totalorder %s15, 3
      %p161 = pnand %p159, %p160
      %p162 = pneg %p161
      // Predicated region
      $region9: #{tpu_custom_call.1} parent=5 // pred_check
        _
      $region10: #{tpu_custom_call.1} parent=5 // pred_check_branch
        %164 = sbr.rel (%p161) target = $region12
      $region11: #{tpu_custom_call.1} parent=5 // pred_region
        %s165 = ssub.s32 %s15, 1
        // Predicated region
        $region13: #{tpu_custom_call.1} parent=11 // pred_check
          %p166 = pneg %p62
        $region14: #{tpu_custom_call.1} parent=11 // pred_check_branch
          %168 = sbr.rel (%p166) target = $region16
        $region15: #{tpu_custom_call.1} parent=11 // pred_region
          _
        $region16: #{tpu_custom_call.1} parent=11 // pred_fallthru
          _
        // Predicated region
        $region17: #{tpu_custom_call.1} parent=11 // pred_check
          %p169 = pneg %p83
        $region18: #{tpu_custom_call.1} parent=11 // pred_check_branch
          %171 = sbr.rel (%p169) target = $region20
        $region19: #{tpu_custom_call.1} parent=11 // pred_region
          _
        $region20: #{tpu_custom_call.1} parent=11 // pred_fallthru
          _
        // Predicated region
        $region21: #{tpu_custom_call.1} parent=11 // pred_check
          %p172 = pneg %p104
        $region22: #{tpu_custom_call.1} parent=11 // pred_check_branch
          %174 = sbr.rel (%p172) target = $region24
        $region23: #{tpu_custom_call.1} parent=11 // pred_region
          _
        $region24: #{tpu_custom_call.1} parent=11 // pred_fallthru
          _
        // Predicated region
        $region25: #{tpu_custom_call.1} parent=11 // pred_check
          %p175 = pneg %p125
        $region26: #{tpu_custom_call.1} parent=11 // pred_check_branch
          %177 = sbr.rel (%p175) target = $region28
        $region27: #{tpu_custom_call.1} parent=11 // pred_region
          _
        $region28: #{tpu_custom_call.1} parent=11 // pred_fallthru
          _
      $region12: #{tpu_custom_call.1} parent=5 // pred_fallthru
        _
      %p178 = scmp.lt.s32.totalorder %s15, 2
      // Predicated region
      $region29: #{tpu_custom_call.1} parent=5 // pred_check
        %p179 = pneg %p178
      $region30: #{tpu_custom_call.1} parent=5 // pred_check_branch
        %181 = sbr.rel (%p179) target = $region32
      $region31: #{tpu_custom_call.1} parent=5 // pred_region
        // Predicated region
        $region33: #{tpu_custom_call.1} parent=31 // pred_check
          %p182 = pneg %p35
        $region34: #{tpu_custom_call.1} parent=31 // pred_check_branch
          %184 = sbr.rel (%p182) target = $region36
        $region35: #{tpu_custom_call.1} parent=31 // pred_region
          %s185 = smul.u32 16, %s15
          %p186 = scmp.lt.s32.totalorder %s185, 31
          %s187 = scalar_select %p186, %s185, 31
          %s188 = smul.addr %s187, 8
          %s189 = scalar_lea.vmem %s0, %s188
          %s190 = smul.u32 16, %s15
        $region36: #{tpu_custom_call.1} parent=31 // pred_fallthru
          _
      $region32: #{tpu_custom_call.1} parent=5 // pred_fallthru
        _
      %p191 = scmp.le.s32.totalorder 1, %s15
      %p192 = scmp.lt.s32.totalorder %s15, 3
      %p193 = pnand %p191, %p192
      %p194 = pneg %p193
      // Predicated region
      $region37: #{tpu_custom_call.1} parent=5 // pred_check
        _
      $region38: #{tpu_custom_call.1} parent=5 // pred_check_branch
        %196 = sbr.rel (%p193) target = $region40
      $region39: #{tpu_custom_call.1} parent=5 // pred_region
        %s197 = ssub.s32 %s15, 1
        %s198 = smul.u32 16, %s20
        %p199 = scmp.lt.s32.totalorder %s198, 31
        %s200 = scalar_select %p199, %s198, 31
        %s201 = smul.addr %s200, 8
        %s202 = scalar_lea.vmem %s0, %s201
        %p203 = pneg %p41
        %p204 = pneg %p38
        %p205 = pneg %p62
        %p206 = pneg %p59
        %p207 = pneg %p83
        %p208 = pneg %p80
        %p209 = pneg %p104
        %p210 = pneg %p101
        %p211 = pneg %p125
        %p212 = pneg %p122
        %p213 = pneg %p151
        %p214 = pneg %p148
        %s215 = sand.u32 %s138, 1
        %s216 = scalar_lea.sflag [#allocation4], %s215
        %s217 = sand.u32 %s138, 1
        %s218 = scalar_lea.vmem [#allocation3], %s217
        %s219 = smul.u32 16, %s20
        %p220 = scmp.lt.s32.totalorder %s219, 31
        %s221 = scalar_select %p220, %s219, 31
        %s222 = smul.addr %s221, 8
        %s223 = scalar_lea.vmem %s0, %s222
        %s224 = smul.u32 16, %s20
        %v225 = vld [vmem:[%s223] sm:$0xff]
        %v226 = vld [vmem:[%s223 + $0x8] sm:$0xff]
        %v227 = vld [vmem:[%s223 + $0x10] sm:$0xff]
        %v228 = vld [vmem:[%s223 + $0x18] sm:$0xff]
        %v229 = vld [vmem:[%s223 + $0x20] sm:$0xff]
        %v230 = vld [vmem:[%s223 + $0x28] sm:$0xff]
        %v231 = vld [vmem:[%s223 + $0x30] sm:$0xff]
        %v232 = vld [vmem:[%s223 + $0x38] sm:$0xff]
        %v233 = vld [vmem:[%s223 + $0x40] sm:$0xff]
        %v234 = vld [vmem:[%s223 + $0x48] sm:$0xff]
        %v235 = vld [vmem:[%s223 + $0x50] sm:$0xff]
        %v236 = vld [vmem:[%s223 + $0x58] sm:$0xff]
        %v237 = vld [vmem:[%s223 + $0x60] sm:$0xff]
        %v238 = vld [vmem:[%s223 + $0x68] sm:$0xff]
        %v239 = vld [vmem:[%s223 + $0x70] sm:$0xff]
        %v240 = vld [vmem:[%s223 + $0x78] sm:$0xff]
        %v241 = vld [vmem:[%s1] sm:$0xff]
        %v242 = vld [vmem:[%s1 + $0x8] sm:$0xff]
        %v243 = vld [vmem:[%s1 + $0x10] sm:$0xff]
        %v244 = vld [vmem:[%s1 + $0x18] sm:$0xff]
        %v245 = vld [vmem:[%s2] sm:$0x1]
        %v247 = vlaneseq
        %v248 = vshrl.u32 %v247, 7
        %v249 = vsub.s32 0, %v248
        %v250 = vrot.slane %v245, %v249
        %vm252 = vcmask 261120
        %v254 = vsel %vm252, %v225, 0
        %v257 = vsel %vm252, %v226, 0
        %v260 = vsel %vm252, %v227, 0
        %v263 = vsel %vm252, %v228, 0
        %v266 = vsel %vm252, %v229, 0
        %v269 = vsel %vm252, %v230, 0
        %v272 = vsel %vm252, %v231, 0
        %v275 = vsel %vm252, %v232, 0
        %v278 = vsel %vm252, %v233, 0
        %v281 = vsel %vm252, %v234, 0
        %v284 = vsel %vm252, %v235, 0
        %v287 = vsel %vm252, %v236, 0
        %v290 = vsel %vm252, %v237, 0
        %v293 = vsel %vm252, %v238, 0
        %v296 = vsel %vm252, %v239, 0
        %v299 = vsel %vm252, %v240, 0
        %301 = vmatprep.subr.mxu0 0.0
        %302 = vmatpush1.msra.mxu0 0.0
        %303 = vmatprep.subr.mxu0 0.0
        %304 = vmatpush1.msra.mxu0 0.0
        %305 = vmatprep.subr.mxu0 0.0
        %306 = vmatpush1.msra.mxu0 0.0
        %307 = vmatprep.subr.mxu0 0.0
        %308 = vmatpush1.msra.mxu0 0.0
        %309 = vmatprep.subr.mxu0 0.0
        %310 = vmatpush1.msra.mxu0 0.0
        %311 = vmatprep.subr.mxu0 0.0
        %312 = vmatpush1.msra.mxu0 0.0
        %313 = vmatprep.subr.mxu0 0.0
        %314 = vmatpush1.msra.mxu0 0.0
        %315 = vmatprep.subr.mxu0 0.0
        %316 = vmatpush1.msra.mxu0 0.0
        %317 = vmatprep.subr.mxu0 0.0
        %318 = vmatpush1.msra.mxu0 0.0
        %319 = vmatprep.subr.mxu0 0.0
        %320 = vmatpush1.msra.mxu0 0.0
        %321 = vmatprep.subr.mxu0 0.0
        %322 = vmatpush1.msra.mxu0 0.0
        %323 = vmatprep.subr.mxu0 0.0
        %324 = vmatpush1.msra.mxu0 0.0
        %325 = vmatprep.subr.mxu0 0.0
        %326 = vmatpush1.msra.mxu0 %v244
        %327 = vmatprep.subr.mxu0 0.0
        %328 = vmatpush1.msra.mxu0 %v243
        %329 = vmatprep.subr.mxu0 0.0
        %330 = vmatpush1.msra.mxu0 %v242
        %331 = vmatprep.subr.mxu0 0.0
        %332 = vmatpush1.msra.mxu0 %v241
        %333 = vmatprep.subr.mxu0 0.0
        %334 = vmatpush2.msra.mxu0 0.0
        %335 = vmatprep.subr.mxu0 0.0
        %336 = vmatpush2.msra.mxu0 0.0
        %337 = vmatprep.subr.mxu0 0.0
        %338 = vmatpush2.msra.mxu0 0.0
        %339 = vmatprep.subr.mxu0 0.0
        %340 = vmatpush2.msra.mxu0 0.0
        %341 = vmatprep.subr.mxu0 0.0
        %342 = vmatpush2.msra.mxu0 0.0
        %343 = vmatprep.subr.mxu0 0.0
        %344 = vmatpush2.msra.mxu0 0.0
        %345 = vmatprep.subr.mxu0 0.0
        %346 = vmatpush2.msra.mxu0 0.0
        %347 = vmatprep.subr.mxu0 0.0
        %348 = vmatpush2.msra.mxu0 0.0
        %349 = vmatprep.subr.mxu0 0.0
        %350 = vmatpush2.msra.mxu0 0.0
        %351 = vmatprep.subr.mxu0 0.0
        %352 = vmatpush2.msra.mxu0 0.0
        %353 = vmatprep.subr.mxu0 0.0
        %354 = vmatpush2.msra.mxu0 0.0
        %355 = vmatprep.subr.mxu0 0.0
        %356 = vmatpush2.msra.mxu0 0.0
        %357 = vmatprep.subr.mxu0 0.0
        %358 = vmatpush2.msra.mxu0 0.0
        %359 = vmatprep.subr.mxu0 0.0
        %360 = vmatpush2.msra.mxu0 0.0
        %361 = vmatprep.subr.mxu0 0.0
        %362 = vmatpush2.msra.mxu0 0.0
        %363 = vmatprep.subr.mxu0 0.0
        %364 = vmatpush2.msra.mxu0 0.0
        %365 = vmatprep.mubr.f32.mxu0 0.0
        %366 = vmatmul.mubr.f32.gmra.mxu0 %v254
        %v367 = vpop.f32.mrf.mxu0
        %v368 = vadd.f32 %v250, %v367
        %v369 = vpop.f32.mrf.mxu0
        %370 = vmatprep.mubr.f32.mxu0 0.0
        %371 = vmatmul.mubr.f32.gmra.mxu0 %v257
        %v372 = vpop.f32.mrf.mxu0
        %v373 = vadd.f32 %v250, %v372
        %v374 = vpop.f32.mrf.mxu0
        %375 = vmatprep.mubr.f32.mxu0 0.0
        %376 = vmatmul.mubr.f32.gmra.mxu0 %v260
        %v377 = vpop.f32.mrf.mxu0
        %v378 = vadd.f32 %v250, %v377
        %v379 = vpop.f32.mrf.mxu0
        %380 = vmatprep.mubr.f32.mxu0 0.0
        %381 = vmatmul.mubr.f32.gmra.mxu0 %v263
        %v382 = vpop.f32.mrf.mxu0
        %v383 = vadd.f32 %v250, %v382
        %v384 = vpop.f32.mrf.mxu0
        %385 = vmatprep.mubr.f32.mxu0 0.0
        %386 = vmatmul.mubr.f32.gmra.mxu0 %v266
        %v387 = vpop.f32.mrf.mxu0
        %v388 = vadd.f32 %v250, %v387
        %v389 = vpop.f32.mrf.mxu0
        %390 = vmatprep.mubr.f32.mxu0 0.0
        %391 = vmatmul.mubr.f32.gmra.mxu0 %v269
        %v392 = vpop.f32.mrf.mxu0
        %v393 = vadd.f32 %v250, %v392
        %v394 = vpop.f32.mrf.mxu0
        %395 = vmatprep.mubr.f32.mxu0 0.0
        %396 = vmatmul.mubr.f32.gmra.mxu0 %v272
        %v397 = vpop.f32.mrf.mxu0
        %v398 = vadd.f32 %v250, %v397
        %v399 = vpop.f32.mrf.mxu0
        %400 = vmatprep.mubr.f32.mxu0 0.0
        %401 = vmatmul.mubr.f32.gmra.mxu0 %v275
        %v402 = vpop.f32.mrf.mxu0
        %v403 = vadd.f32 %v250, %v402
        %v404 = vpop.f32.mrf.mxu0
        %405 = vmatprep.mubr.f32.mxu0 0.0
        %406 = vmatmul.mubr.f32.gmra.mxu0 %v278
        %v407 = vpop.f32.mrf.mxu0
        %v408 = vadd.f32 %v250, %v407
        %v409 = vpop.f32.mrf.mxu0
        %410 = vmatprep.mubr.f32.mxu0 0.0
        %411 = vmatmul.mubr.f32.gmra.mxu0 %v281
        %v412 = vpop.f32.mrf.mxu0
        %v413 = vadd.f32 %v250, %v412
        %v414 = vpop.f32.mrf.mxu0
        %415 = vmatprep.mubr.f32.mxu0 0.0
        %416 = vmatmul.mubr.f32.gmra.mxu0 %v284
        %v417 = vpop.f32.mrf.mxu0
        %v418 = vadd.f32 %v250, %v417
        %v419 = vpop.f32.mrf.mxu0
        %420 = vmatprep.mubr.f32.mxu0 0.0
        %421 = vmatmul.mubr.f32.gmra.mxu0 %v287
        %v422 = vpop.f32.mrf.mxu0
        %v423 = vadd.f32 %v250, %v422
        %v424 = vpop.f32.mrf.mxu0
        %425 = vmatprep.mubr.f32.mxu0 0.0
        %426 = vmatmul.mubr.f32.gmra.mxu0 %v290
        %v427 = vpop.f32.mrf.mxu0
        %v428 = vadd.f32 %v250, %v427
        %v429 = vpop.f32.mrf.mxu0
        %430 = vmatprep.mubr.f32.mxu0 0.0
        %431 = vmatmul.mubr.f32.gmra.mxu0 %v293
        %v432 = vpop.f32.mrf.mxu0
        %v433 = vadd.f32 %v250, %v432
        %v434 = vpop.f32.mrf.mxu0
        %435 = vmatprep.mubr.f32.mxu0 0.0
        %436 = vmatmul.mubr.f32.gmra.mxu0 %v296
        %v437 = vpop.f32.mrf.mxu0
        %v438 = vadd.f32 %v250, %v437
        %v439 = vpop.f32.mrf.mxu0
        %440 = vmatprep.mubr.f32.mxu0 0.0
        %441 = vmatmul.mubr.f32.gmra.mxu0 %v299
        %v442 = vpop.f32.mrf.mxu0
        %v443 = vadd.f32 %v250, %v442
        %v444 = vpop.f32.mrf.mxu0
        %445 = vdwg.mxu0
        %v446 = vmax.f32 %v368, 0.0
        %v447 = vmax.f32 %v373, 0.0
        %v448 = vmax.f32 %v378, 0.0
        %v449 = vmax.f32 %v383, 0.0
        %v450 = vmax.f32 %v388, 0.0
        %v451 = vmax.f32 %v393, 0.0
        %v452 = vmax.f32 %v398, 0.0
        %v453 = vmax.f32 %v403, 0.0
        %v454 = vmax.f32 %v408, 0.0
        %v455 = vmax.f32 %v413, 0.0
        %v456 = vmax.f32 %v418, 0.0
        %v457 = vmax.f32 %v423, 0.0
        %v458 = vmax.f32 %v428, 0.0
        %v459 = vmax.f32 %v433, 0.0
        %v460 = vmax.f32 %v438, 0.0
        %v461 = vmax.f32 %v443, 0.0
        %v462 = vsel %vm252, %v446, 0.0
        %463 = vadd.xlane.f32.xlu0 %v462
        %v464 = vpop.xlane.xlu0 %463
        %v465 = vsel %vm252, %v447, 0.0
        %466 = vadd.xlane.f32.xlu0 %v465
        %v467 = vpop.xlane.xlu0 %466
        %v468 = vsel %vm252, %v448, 0.0
        %469 = vadd.xlane.f32.xlu0 %v468
        %v470 = vpop.xlane.xlu0 %469
        %v471 = vsel %vm252, %v449, 0.0
        %472 = vadd.xlane.f32.xlu0 %v471
        %v473 = vpop.xlane.xlu0 %472
        %v474 = vsel %vm252, %v450, 0.0
        %475 = vadd.xlane.f32.xlu0 %v474
        %v476 = vpop.xlane.xlu0 %475
        %v477 = vsel %vm252, %v451, 0.0
        %478 = vadd.xlane.f32.xlu0 %v477
        %v479 = vpop.xlane.xlu0 %478
        %v480 = vsel %vm252, %v452, 0.0
        %481 = vadd.xlane.f32.xlu0 %v480
        %v482 = vpop.xlane.xlu0 %481
        %v483 = vsel %vm252, %v453, 0.0
        %484 = vadd.xlane.f32.xlu0 %v483
        %v485 = vpop.xlane.xlu0 %484
        %v486 = vsel %vm252, %v454, 0.0
        %487 = vadd.xlane.f32.xlu0 %v486
        %v488 = vpop.xlane.xlu0 %487
        %v489 = vsel %vm252, %v455, 0.0
        %490 = vadd.xlane.f32.xlu0 %v489
        %v491 = vpop.xlane.xlu0 %490
        %v492 = vsel %vm252, %v456, 0.0
        %493 = vadd.xlane.f32.xlu0 %v492
        %v494 = vpop.xlane.xlu0 %493
        %v495 = vsel %vm252, %v457, 0.0
        %496 = vadd.xlane.f32.xlu0 %v495
        %v497 = vpop.xlane.xlu0 %496
        %v498 = vsel %vm252, %v458, 0.0
        %499 = vadd.xlane.f32.xlu0 %v498
        %v500 = vpop.xlane.xlu0 %499
        %v501 = vsel %vm252, %v459, 0.0
        %502 = vadd.xlane.f32.xlu0 %v501
        %v503 = vpop.xlane.xlu0 %502
        %v504 = vsel %vm252, %v460, 0.0
        %505 = vadd.xlane.f32.xlu0 %v504
        %v506 = vpop.xlane.xlu0 %505
        %v507 = vsel %vm252, %v461, 0.0
        %508 = vadd.xlane.f32.xlu0 %v507
        %v509 = vpop.xlane.xlu0 %508
        %v510 = vrcp.pop 32.0
        %v511 = vmul.f32 %v464, %v510
        %v512 = vmul.f32 %v467, %v510
        %v513 = vmul.f32 %v470, %v510
        %v514 = vmul.f32 %v473, %v510
        %v515 = vmul.f32 %v476, %v510
        %v516 = vmul.f32 %v479, %v510
        %v517 = vmul.f32 %v482, %v510
        %v518 = vmul.f32 %v485, %v510
        %v519 = vmul.f32 %v488, %v510
        %v520 = vmul.f32 %v491, %v510
        %v521 = vmul.f32 %v494, %v510
        %v522 = vmul.f32 %v497, %v510
        %v523 = vmul.f32 %v500, %v510
        %v524 = vmul.f32 %v503, %v510
        %v525 = vmul.f32 %v506, %v510
        %v526 = vmul.f32 %v509, %v510
        %v527 = vsub.f32 %v446, %v511
        %v528 = vsub.f32 %v447, %v512
        %v529 = vsub.f32 %v448, %v513
        %v530 = vsub.f32 %v449, %v514
        %v531 = vsub.f32 %v450, %v515
        %v532 = vsub.f32 %v451, %v516
        %v533 = vsub.f32 %v452, %v517
        %v534 = vsub.f32 %v453, %v518
        %v535 = vsub.f32 %v454, %v519
        %v536 = vsub.f32 %v455, %v520
        %v537 = vsub.f32 %v456, %v521
        %v538 = vsub.f32 %v457, %v522
        %v539 = vsub.f32 %v458, %v523
        %v540 = vsub.f32 %v459, %v524
        %v541 = vsub.f32 %v460, %v525
        %v542 = vsub.f32 %v461, %v526
        %v543 = vmul.f32 %v527, %v527
        %v544 = vmul.f32 %v528, %v528
        %v545 = vmul.f32 %v529, %v529
        %v546 = vmul.f32 %v530, %v530
        %v547 = vmul.f32 %v531, %v531
        %v548 = vmul.f32 %v532, %v532
        %v549 = vmul.f32 %v533, %v533
        %v550 = vmul.f32 %v534, %v534
        %v551 = vmul.f32 %v535, %v535
        %v552 = vmul.f32 %v536, %v536
        %v553 = vmul.f32 %v537, %v537
        %v554 = vmul.f32 %v538, %v538
        %v555 = vmul.f32 %v539, %v539
        %v556 = vmul.f32 %v540, %v540
        %v557 = vmul.f32 %v541, %v541
        %v558 = vmul.f32 %v542, %v542
        %v559 = vsel %vm252, %v543, 0.0
        %560 = vadd.xlane.f32.xlu0 %v559
        %v561 = vpop.xlane.xlu0 %560
        %v562 = vsel %vm252, %v544, 0.0
        %563 = vadd.xlane.f32.xlu0 %v562
        %v564 = vpop.xlane.xlu0 %563
        %v565 = vsel %vm252, %v545, 0.0
        %566 = vadd.xlane.f32.xlu0 %v565
        %v567 = vpop.xlane.xlu0 %566
        %v568 = vsel %vm252, %v546, 0.0
        %569 = vadd.xlane.f32.xlu0 %v568
        %v570 = vpop.xlane.xlu0 %569
        %v571 = vsel %vm252, %v547, 0.0
        %572 = vadd.xlane.f32.xlu0 %v571
        %v573 = vpop.xlane.xlu0 %572
        %v574 = vsel %vm252, %v548, 0.0
        %575 = vadd.xlane.f32.xlu0 %v574
        %v576 = vpop.xlane.xlu0 %575
        %v577 = vsel %vm252, %v549, 0.0
        %578 = vadd.xlane.f32.xlu0 %v577
        %v579 = vpop.xlane.xlu0 %578
        %v580 = vsel %vm252, %v550, 0.0
        %581 = vadd.xlane.f32.xlu0 %v580
        %v582 = vpop.xlane.xlu0 %581
        %v583 = vsel %vm252, %v551, 0.0
        %584 = vadd.xlane.f32.xlu0 %v583
        %v585 = vpop.xlane.xlu0 %584
        %v586 = vsel %vm252, %v552, 0.0
        %587 = vadd.xlane.f32.xlu0 %v586
        %v588 = vpop.xlane.xlu0 %587
        %v589 = vsel %vm252, %v553, 0.0
        %590 = vadd.xlane.f32.xlu0 %v589
        %v591 = vpop.xlane.xlu0 %590
        %v592 = vsel %vm252, %v554, 0.0
        %593 = vadd.xlane.f32.xlu0 %v592
        %v594 = vpop.xlane.xlu0 %593
        %v595 = vsel %vm252, %v555, 0.0
        %596 = vadd.xlane.f32.xlu0 %v595
        %v597 = vpop.xlane.xlu0 %596
        %v598 = vsel %vm252, %v556, 0.0
        %599 = vadd.xlane.f32.xlu0 %v598
        %v600 = vpop.xlane.xlu0 %599
        %v601 = vsel %vm252, %v557, 0.0
        %602 = vadd.xlane.f32.xlu0 %v601
        %v603 = vpop.xlane.xlu0 %602
        %v604 = vsel %vm252, %v558, 0.0
        %605 = vadd.xlane.f32.xlu0 %v604
        %v606 = vpop.xlane.xlu0 %605
        %v607 = vmul.f32 %v561, %v510
        %v608 = vmul.f32 %v564, %v510
        %v609 = vmul.f32 %v567, %v510
        %v610 = vmul.f32 %v570, %v510
        %v611 = vmul.f32 %v573, %v510
        %v612 = vmul.f32 %v576, %v510
        %v613 = vmul.f32 %v579, %v510
        %v614 = vmul.f32 %v582, %v510
        %v615 = vmul.f32 %v585, %v510
        %v616 = vmul.f32 %v588, %v510
        %v617 = vmul.f32 %v591, %v510
        %v618 = vmul.f32 %v594, %v510
        %v619 = vmul.f32 %v597, %v510
        %v620 = vmul.f32 %v600, %v510
        %v621 = vmul.f32 %v603, %v510
        %v622 = vmul.f32 %v606, %v510
        %v623 = vadd.f32 %v607, 1e-12
        %v624 = vadd.f32 %v608, 1e-12
        %v625 = vadd.f32 %v609, 1e-12
        %v626 = vadd.f32 %v610, 1e-12
        %v627 = vadd.f32 %v611, 1e-12
        %v628 = vadd.f32 %v612, 1e-12
        %v629 = vadd.f32 %v613, 1e-12
        %v630 = vadd.f32 %v614, 1e-12
        %v631 = vadd.f32 %v615, 1e-12
        %v632 = vadd.f32 %v616, 1e-12
        %v633 = vadd.f32 %v617, 1e-12
        %v634 = vadd.f32 %v618, 1e-12
        %v635 = vadd.f32 %v619, 1e-12
        %v636 = vadd.f32 %v620, 1e-12
        %v637 = vadd.f32 %v621, 1e-12
        %v638 = vadd.f32 %v622, 1e-12
        %v639 = vrsqrt.pop %v623
        %v640 = vrsqrt.pop %v624
        %v641 = vrsqrt.pop %v625
        %v642 = vrsqrt.pop %v626
        %v643 = vrsqrt.pop %v627
        %v644 = vrsqrt.pop %v628
        %v645 = vrsqrt.pop %v629
        %v646 = vrsqrt.pop %v630
        %v647 = vrsqrt.pop %v631
        %v648 = vrsqrt.pop %v632
        %v649 = vrsqrt.pop %v633
        %v650 = vrsqrt.pop %v634
        %v651 = vrsqrt.pop %v635
        %v652 = vrsqrt.pop %v636
        %v653 = vrsqrt.pop %v637
        %v654 = vrsqrt.pop %v638
        %v655 = vmul.f32 %v527, %v639
        %v656 = vmul.f32 %v528, %v640
        %v657 = vmul.f32 %v529, %v641
        %v658 = vmul.f32 %v530, %v642
        %v659 = vmul.f32 %v531, %v643
        %v660 = vmul.f32 %v532, %v644
        %v661 = vmul.f32 %v533, %v645
        %v662 = vmul.f32 %v534, %v646
        %v663 = vmul.f32 %v535, %v647
        %v664 = vmul.f32 %v536, %v648
        %v665 = vmul.f32 %v537, %v649
        %v666 = vmul.f32 %v538, %v650
        %v667 = vmul.f32 %v539, %v651
        %v668 = vmul.f32 %v540, %v652
        %v669 = vmul.f32 %v541, %v653
        %v670 = vmul.f32 %v542, %v654
        %v671 = vld [vmem:[%s3] sm:$0xff]
        %v673 = vsel %vm252, %v671, 0
        %v676 = vsel %vm252, %v655, 0
        %v679 = vsel %vm252, %v656, 0
        %v682 = vsel %vm252, %v657, 0
        %v685 = vsel %vm252, %v658, 0
        %v688 = vsel %vm252, %v659, 0
        %v691 = vsel %vm252, %v660, 0
        %v694 = vsel %vm252, %v661, 0
        %v697 = vsel %vm252, %v662, 0
        %v700 = vsel %vm252, %v663, 0
        %v703 = vsel %vm252, %v664, 0
        %v706 = vsel %vm252, %v665, 0
        %v709 = vsel %vm252, %v666, 0
        %v712 = vsel %vm252, %v667, 0
        %v715 = vsel %vm252, %v668, 0
        %v718 = vsel %vm252, %v669, 0
        %v721 = vsel %vm252, %v670, 0
        %723 = vmatprep.subr.mxu0 0.0
        %724 = vmatpush1.xpose.msra.mxu0 %v721
        %725 = vmatprep.subr.mxu0 0.0
        %726 = vmatpush1.xpose.msra.mxu0 %v718
        %727 = vmatprep.subr.mxu0 0.0
        %728 = vmatpush1.xpose.msra.mxu0 %v715
        %729 = vmatprep.subr.mxu0 0.0
        %730 = vmatpush1.xpose.msra.mxu0 %v712
        %731 = vmatprep.subr.mxu0 0.0
        %732 = vmatpush1.xpose.msra.mxu0 %v709
        %733 = vmatprep.subr.mxu0 0.0
        %734 = vmatpush1.xpose.msra.mxu0 %v706
        %735 = vmatprep.subr.mxu0 0.0
        %736 = vmatpush1.xpose.msra.mxu0 %v703
        %737 = vmatprep.subr.mxu0 0.0
        %738 = vmatpush1.xpose.msra.mxu0 %v700
        %739 = vmatprep.subr.mxu0 0.0
        %740 = vmatpush1.xpose.msra.mxu0 %v697
        %741 = vmatprep.subr.mxu0 0.0
        %742 = vmatpush1.xpose.msra.mxu0 %v694
        %743 = vmatprep.subr.mxu0 0.0
        %744 = vmatpush1.xpose.msra.mxu0 %v691
        %745 = vmatprep.subr.mxu0 0.0
        %746 = vmatpush1.xpose.msra.mxu0 %v688
        %747 = vmatprep.subr.mxu0 0.0
        %748 = vmatpush1.xpose.msra.mxu0 %v685
        %749 = vmatprep.subr.mxu0 0.0
        %750 = vmatpush1.xpose.msra.mxu0 %v682
        %751 = vmatprep.subr.mxu0 0.0
        %752 = vmatpush1.xpose.msra.mxu0 %v679
        %753 = vmatprep.subr.mxu0 0.0
        %754 = vmatpush1.xpose.msra.mxu0 %v676
        %755 = vmatprep.subr.mxu0 0.0
        %756 = vmatpush2.xpose.msra.mxu0 0.0
        %757 = vmatprep.subr.mxu0 0.0
        %758 = vmatpush2.xpose.msra.mxu0 0.0
        %759 = vmatprep.subr.mxu0 0.0
        %760 = vmatpush2.xpose.msra.mxu0 0.0
        %761 = vmatprep.subr.mxu0 0.0
        %762 = vmatpush2.xpose.msra.mxu0 0.0
        %763 = vmatprep.subr.mxu0 0.0
        %764 = vmatpush2.xpose.msra.mxu0 0.0
        %765 = vmatprep.subr.mxu0 0.0
        %766 = vmatpush2.xpose.msra.mxu0 0.0
        %767 = vmatprep.subr.mxu0 0.0
        %768 = vmatpush2.xpose.msra.mxu0 0.0
        %769 = vmatprep.subr.mxu0 0.0
        %770 = vmatpush2.xpose.msra.mxu0 0.0
        %771 = vmatprep.subr.mxu0 0.0
        %772 = vmatpush2.xpose.msra.mxu0 0.0
        %773 = vmatprep.subr.mxu0 0.0
        %774 = vmatpush2.xpose.msra.mxu0 0.0
        %775 = vmatprep.subr.mxu0 0.0
        %776 = vmatpush2.xpose.msra.mxu0 0.0
        %777 = vmatprep.subr.mxu0 0.0
        %778 = vmatpush2.xpose.msra.mxu0 0.0
        %779 = vmatprep.subr.mxu0 0.0
        %780 = vmatpush2.xpose.msra.mxu0 0.0
        %781 = vmatprep.subr.mxu0 0.0
        %782 = vmatpush2.xpose.msra.mxu0 0.0
        %783 = vmatprep.subr.mxu0 0.0
        %784 = vmatpush2.xpose.msra.mxu0 0.0
        %785 = vmatprep.subr.mxu0 0.0
        %786 = vmatpush2.xpose.msra.mxu0 0.0
        %787 = vmatprep.mubr.f32.mxu0 0.0
        %788 = vmatmul.mubr.f32.gmra.mxu0 %v673
        %v789 = vpop.f32.mrf.mxu0
        %v790 = vadd.f32 0.0, %v789
        %v791 = vpop.f32.mrf.mxu0
        %792 = vdwg.mxu0
        %s793 = sld [smem:[#allocation2]]
        %v794 = vstv %s793
        %v795 = vadd.f32 %v790, %v794
        %796 = vst [vmem:[%s218] sm:$0x1] %v795
        %s797 = sand.u32 %s138, 1
        %s798 = scalar_lea.sflag [#allocation4], %s797
        %s799 = sand.u32 %s138, 1
        %s800 = scalar_lea.vmem [#allocation3], %s799
        // Predicated region
        $region41: #{tpu_custom_call.1} parent=39 // pred_check
          %p801 = pneg %p148
        $region42: #{tpu_custom_call.1} parent=39 // pred_check_branch
          %803 = sbr.rel (%p801) target = $region44
        $region43: #{tpu_custom_call.1} parent=39 // pred_region
          %s805 = ssub.s32 16, 16
          %806 = vsyncadd %s798, %s805
          %s807 = smul.addr %s20, 16
          %s808 = scalar_lea.hbm %s5, %s807
          %s810 = sshll.u32 %s800, 4
          %s811 = int_to_ptr.vmem [resolvable:$true] %s810
          %813 = dma.vmem_to_hbm [thread:$0]  %s811, 16, %s808, %s798
        $region44: #{tpu_custom_call.1} parent=39 // pred_fallthru
          _
      $region40: #{tpu_custom_call.1} parent=5 // pred_fallthru
        _
      %p814 = scmp.le.s32.totalorder 2, %s15
      // Predicated region
      $region45: #{tpu_custom_call.1} parent=5 // pred_check
        %p815 = pneg %p814
      $region46: #{tpu_custom_call.1} parent=5 // pred_check_branch
        %817 = sbr.rel (%p815) target = $region48
      $region47: #{tpu_custom_call.1} parent=5 // pred_region
        %s818 = ssub.s32 %s15, 2
        // Predicated region
        $region49: #{tpu_custom_call.1} parent=47 // pred_check
          %p819 = pneg %p154
        $region50: #{tpu_custom_call.1} parent=47 // pred_check_branch
          %821 = sbr.rel (%p819) target = $region52
        $region51: #{tpu_custom_call.1} parent=47 // pred_region
          %s822 = sand.u32 %s139, 1
          %s823 = scalar_lea.sflag [#allocation4], %s822
          %s824 = sand.u32 %s139, 1
          %s825 = scalar_lea.vmem [#allocation3], %s824
          %826 = dma.done %s823, 16
        $region52: #{tpu_custom_call.1} parent=47 // pred_fallthru
          _
      $region48: #{tpu_custom_call.1} parent=5 // pred_fallthru
        _
    $region6: #{tpu_custom_call.1} parent=1 // loop_footer
      %s19 = sadd.s32 1, %s15
    $region7: #{tpu_custom_call.1} parent=1 // loop_footer_branch
      %14 = sbr.rel target = $region3
    $region8: #{tpu_custom_call.1} parent=1 // loop_exit
      _
    %827 = vsyncpa [#allocation4], 1
    %s828 = scalar_lea.sflag [#allocation4], 1
    %829 = vsyncpa %s828, 1

</llo_original>
